<compile_context>
chip_gen: v7x
topology: tpu7x:2x2x1
jax: 0.10.0
libtpu: 0.0.40
codegen_flags: <defaults>
</compile_context>

<pallas_src>
import jax
import jax.numpy as jnp
from jax.experimental import pallas as pl
from jax.experimental.pallas import tpu as pltpu  # noqa: F401  (TPU backend)


def _fused_se_conv1x1_kernel(gate_ref, w_ref, x_ref, o_ref):
    # gate_ref: (1, C_in)      -- raw SE logits (pre-hardsigmoid)
    # w_ref:    (C_out, C_in)  -- 1x1 conv weight, native PyTorch layout
    # x_ref:    (C_in, M)      -- activations, native NCHW-flat layout, M = H*W
    # o_ref:    (C_out, M)
    #
    # PyTorch Hardsigmoid: clamp(x/6 + 1/2, 0, 1)
    hs = jnp.clip(gate_ref[...] * (1.0 / 6.0) + 0.5, 0.0, 1.0)      # (1, C_in)
    # Fold the per-channel gate into the small weight matrix instead of the
    # activation: (W * hs) @ X == W @ (diag(hs) * X)  -- exactly equivalent
    # up to f32 rounding (well within the 1e-4 tolerance).
    w_scaled = w_ref[...] * hs                                      # (C_out, C_in)
    o_ref[...] = jnp.dot(
        w_scaled, x_ref[...], preferred_element_type=jnp.float32
    ).astype(o_ref.dtype)


def _fused_hardsigmoid_mul_conv1x1(x55, x51, weight):
    """x55: [N, C_in, 1, 1], x51: [N, C_in, H, W], weight: [C_out, C_in, 1, 1].

    Returns [N, C_out, H, W] (same semantics as the PyTorch module)."""
    N, C_in, H, W = x51.shape
    C_out = weight.shape[0]
    assert N == 1, "this synthetic kernel is written for N == 1 (as in the module)"

    M = H * W
    # Zero-copy reshapes for N == 1 (no transposes anywhere in the wrapper).
    x2d = x51.reshape(C_in, M)            # (C_in, M)  -- native NCHW flat
    gate2d = x55.reshape(1, C_in)         # (1, C_in)
    w2d = weight.reshape(C_out, C_in)     # (C_out, C_in) -- native layout, no .T

    flops = 2 * M * C_in * C_out
    bytes_accessed = 4 * (C_in * M + C_in + C_out * C_in + C_out * M)

    out2d = pl.pallas_call(
        _fused_se_conv1x1_kernel,
        out_shape=jax.ShapeDtypeStruct((C_out, M), jnp.float32),
        # No grid: single step, everything resident in VMEM for the call.
        in_specs=[
            pl.BlockSpec((1, C_in), lambda: (0, 0)),
            pl.BlockSpec((C_out, C_in), lambda: (0, 0)),
            pl.BlockSpec((C_in, M), lambda: (0, 0)),
        ],
        out_specs=pl.BlockSpec((C_out, M), lambda: (0, 0)),
        cost_estimate=pl.CostEstimate(
            flops=flops, transcendentals=0, bytes_accessed=bytes_accessed
        ),
    )(gate2d, w2d, x2d)

    # (C_out, M) -> (N, C_out, H, W): zero-copy.
    return out2d.reshape(N, C_out, H, W)


# Jit the wrapper: repeated calls pay no Python/dispatch overhead and XLA keeps
# the zero-copy reshapes fused around the custom call.
fused_hardsigmoid_mul_conv1x1 = jax.jit(_fused_hardsigmoid_mul_conv1x1)


def _reference(x55, x51, weight):
    hs = jnp.clip(x55 / 6.0 + 0.5, 0.0, 1.0)
    x57 = hs * x51
    # 1x1 conv, no bias == einsum over the channel dim
    return jnp.einsum("nchw,oc->nohw", x57, weight.reshape(weight.shape[0], -1))


if __name__ == "__main__":
    key = jax.random.PRNGKey(0)
    k1, k2, k3 = jax.random.split(key, 3)

    N, C_in, C_out, H, W = 1, 240, 40, 14, 14
    x51 = jax.random.normal(k1, (N, C_in, H, W), dtype=jnp.float32)
    x55 = jax.random.normal(k2, (N, C_in, 1, 1), dtype=jnp.float32)
    # Deterministic conv weight (kaiming-uniform-ish scale for fan_in = 240)
    bound = 1.0 / (C_in ** 0.5)
    weight = jax.random.uniform(k3, (C_out, C_in, 1, 1), dtype=jnp.float32,
                                minval=-bound, maxval=bound)

    out = fused_hardsigmoid_mul_conv1x1(x55, x51, weight)
    out = jax.block_until_ready(out)

    ref = _reference(x55, x51, weight)
    assert out.shape == (N, C_out, H, W)
    assert jnp.allclose(out, ref, atol=1e-4, rtol=1e-4), "mismatch vs reference"

    print("KERNEL_OK")
</pallas_src>

<mosaic_0001>
module attributes {stable_mosaic.version = 11 : i64} {
  func.func @_fused_se_conv1x1_kernel(%arg0: memref<1x240xf32, #tpu.memory_space<vmem>>, %arg1: memref<40x240xf32, #tpu.memory_space<vmem>>, %arg2: memref<240x196xf32, #tpu.memory_space<vmem>>, %arg3: memref<40x196xf32, #tpu.memory_space<vmem>>) attributes {dimension_semantics = [], scalar_prefetch = 0 : i64, scratch_operands = 0 : i64, tpu.core_type = #tpu.core_type<tc>} {
    %c0 = arith.constant 0 : index
    %c0_0 = arith.constant 0 : index
    %0 = vector.load %arg0[%c0, %c0_0] : memref<1x240xf32, #tpu.memory_space<vmem>>, vector<1x240xf32>
    %cst = arith.constant 0.166666672 : f32
    %1 = vector.broadcast %cst : f32 to vector<1x240xf32>
    %2 = arith.mulf %0, %1 : vector<1x240xf32>
    %cst_1 = arith.constant 5.000000e-01 : f32
    %3 = vector.broadcast %cst_1 : f32 to vector<1x240xf32>
    %4 = arith.addf %2, %3 : vector<1x240xf32>
    %cst_2 = arith.constant 0.000000e+00 : f32
    %cst_3 = arith.constant 1.000000e+00 : f32
    %5 = vector.broadcast %cst_2 : f32 to vector<1x240xf32>
    %6 = arith.maximumf %5, %4 : vector<1x240xf32>
    %7 = vector.broadcast %cst_3 : f32 to vector<1x240xf32>
    %8 = arith.minimumf %7, %6 : vector<1x240xf32>
    %c0_4 = arith.constant 0 : index
    %c0_5 = arith.constant 0 : index
    %9 = vector.load %arg1[%c0_4, %c0_5] : memref<40x240xf32, #tpu.memory_space<vmem>>, vector<40x240xf32>
    %10 = vector.broadcast %8 : vector<1x240xf32> to vector<40x240xf32>
    %11 = arith.mulf %9, %10 : vector<40x240xf32>
    %c0_6 = arith.constant 0 : index
    %c0_7 = arith.constant 0 : index
    %12 = vector.load %arg2[%c0_6, %c0_7] : memref<240x196xf32, #tpu.memory_space<vmem>>, vector<240x196xf32>
    %cst_8 = arith.constant dense<0.000000e+00> : vector<40x196xf32>
    %13 = tpu.matmul %11, %12, %cst_8 {dimension_numbers = #tpu.dot_dimension_numbers<[1], [0], [0], [1], [0, 0, 1, 1], [], []>} : vector<40x240xf32>, vector<240x196xf32>, vector<40x196xf32> -> vector<40x196xf32>
    %c0_9 = arith.constant 0 : index
    %c0_10 = arith.constant 0 : index
    %14 = vector.load %arg3[%c0_9, %c0_10] : memref<40x196xf32, #tpu.memory_space<vmem>>, vector<40x196xf32>
    tpu.vector_store %arg3[%c0_9, %c0_10], %13 {strides = array<i32>} : memref<40x196xf32, #tpu.memory_space<vmem>>, vector<40x196xf32>,
    return
  }
}

</mosaic_0001>

<llo_original>
// kernel: _fused_hardsigmoid_mul_conv1x1.1
$region0: #{_fused_hardsigmoid_mul_conv1x1.1}
  #allocation0 [shape = 'u32[]', space=smem, size = 0x4, offset = 0x4, fixed_abs, tag = 'smem constant byte address 0x4 - core index']
  #allocation1 [shape = 'u32[144,128]{1,0:T(1,128)}', space=vmem, size = 0x12000, scoped, tag = 'internal scratch']
  %s0 = inlined_call_operand.vmem [shape: f32[1,240], index: 0, kind: input, shape index: {}]
  %s1 = inlined_call_operand.vmem [shape: f32[40,240], index: 1, kind: input, shape index: {}]
  %s2 = inlined_call_operand.vmem [shape: f32[240,196], index: 2, kind: input, shape index: {}]
  %s3 = inlined_call_operand.vmem [shape: f32[40,196], index: 3, kind: output, shape index: {}]
  %s4 = sld [smem:[#allocation0]]
  $region22: #{_fused_hardsigmoid_mul_conv1x1.1} parent=0
    _
  %s6 = ssub.s32 1, %s4
  %s7 = scalar_select 0, %s6, %s4
  // Predicated region
  $region2: #{_fused_hardsigmoid_mul_conv1x1.1} parent=0 // pred_check
    _
  $region3: #{_fused_hardsigmoid_mul_conv1x1.1} parent=0 // pred_check_branch
    %9 = sbr.rel (0) target = $region5
  $region4: #{_fused_hardsigmoid_mul_conv1x1.1} parent=0 // pred_region
    _
  $region5: #{_fused_hardsigmoid_mul_conv1x1.1} parent=0 // pred_fallthru
    _
  // Predicated region
  $region6: #{_fused_hardsigmoid_mul_conv1x1.1} parent=0 // pred_check
    _
  $region7: #{_fused_hardsigmoid_mul_conv1x1.1} parent=0 // pred_check_branch
    %11 = sbr.rel (0) target = $region9
  $region8: #{_fused_hardsigmoid_mul_conv1x1.1} parent=0 // pred_region
    _
  $region9: #{_fused_hardsigmoid_mul_conv1x1.1} parent=0 // pred_fallthru
    _
  // Predicated region
  $region10: #{_fused_hardsigmoid_mul_conv1x1.1} parent=0 // pred_check
    _
  $region11: #{_fused_hardsigmoid_mul_conv1x1.1} parent=0 // pred_check_branch
    %13 = sbr.rel (0) target = $region13
  $region12: #{_fused_hardsigmoid_mul_conv1x1.1} parent=0 // pred_region
    _
  $region13: #{_fused_hardsigmoid_mul_conv1x1.1} parent=0 // pred_fallthru
    _
  %v14 = vld [vmem:[%s0] sm:$0x3]
  %v15 = vmul.f32 %v14, 0.16666667
  %v16 = vadd.f32 %v15, 0.5
  %v17 = vmax.f32 %v16, 0.0
  %v18 = vmin.f32 %v17, 1.0
  %v19 = vld [vmem:[%s1] sm:$0xff]
  %v20 = vld [vmem:[%s1 + $0x8] sm:$0xff]
  %v21 = vld [vmem:[%s1 + $0x10] sm:$0xff]
  %v22 = vld [vmem:[%s1 + $0x18] sm:$0xff]
  %v23 = vld [vmem:[%s1 + $0x20] sm:$0xff]
  %v24 = vld [vmem:[%s1 + $0x28] sm:$0xff]
  %v25 = vld [vmem:[%s1 + $0x30] sm:$0xff]
  %v26 = vld [vmem:[%s1 + $0x38] sm:$0xff]
  %v27 = vld [vmem:[%s1 + $0x40] sm:$0xff]
  %v28 = vld [vmem:[%s1 + $0x48] sm:$0xff]
  %v30 = vlaneseq
  %v31 = vshrl.u32 %v30, 7
  %v32 = vsub.s32 0, %v31
  %v33 = vrot.slane %v18, %v32
  %v34 = vlaneseq
  %v35 = vshrl.u32 %v34, 7
  %v36 = vsub.s32 1, %v35
  %v37 = vrot.slane %v18, %v36
  %v40 = vmul.f32 %v19, %v33
  %v41 = vmul.f32 %v20, %v37
  %v42 = vmul.f32 %v21, %v33
  %v43 = vmul.f32 %v22, %v37
  %v44 = vmul.f32 %v23, %v33
  %v45 = vmul.f32 %v24, %v37
  %v46 = vmul.f32 %v25, %v33
  %v47 = vmul.f32 %v26, %v37
  %v48 = vmul.f32 %v27, %v33
  %v49 = vmul.f32 %v28, %v37
  %v50 = vld [vmem:[%s2] sm:$0xff]
  %v51 = vld [vmem:[%s2 + $0x8] sm:$0xff]
  %v52 = vld [vmem:[%s2 + $0x10] sm:$0xff]
  %v53 = vld [vmem:[%s2 + $0x18] sm:$0xff]
  %v54 = vld [vmem:[%s2 + $0x20] sm:$0xff]
  %v55 = vld [vmem:[%s2 + $0x28] sm:$0xff]
  %v56 = vld [vmem:[%s2 + $0x30] sm:$0xff]
  %v57 = vld [vmem:[%s2 + $0x38] sm:$0xff]
  %v58 = vld [vmem:[%s2 + $0x40] sm:$0xff]
  %v59 = vld [vmem:[%s2 + $0x48] sm:$0xff]
  %v60 = vld [vmem:[%s2 + $0x50] sm:$0xff]
  %v61 = vld [vmem:[%s2 + $0x58] sm:$0xff]
  %v62 = vld [vmem:[%s2 + $0x60] sm:$0xff]
  %v63 = vld [vmem:[%s2 + $0x68] sm:$0xff]
  %v64 = vld [vmem:[%s2 + $0x70] sm:$0xff]
  %v65 = vld [vmem:[%s2 + $0x78] sm:$0xff]
  %v66 = vld [vmem:[%s2 + $0x80] sm:$0xff]
  %v67 = vld [vmem:[%s2 + $0x88] sm:$0xff]
  %v68 = vld [vmem:[%s2 + $0x90] sm:$0xff]
  %v69 = vld [vmem:[%s2 + $0x98] sm:$0xff]
  %v70 = vld [vmem:[%s2 + $0xa0] sm:$0xff]
  %v71 = vld [vmem:[%s2 + $0xa8] sm:$0xff]
  %v72 = vld [vmem:[%s2 + $0xb0] sm:$0xff]
  %v73 = vld [vmem:[%s2 + $0xb8] sm:$0xff]
  %v74 = vld [vmem:[%s2 + $0xc0] sm:$0xff]
  %v75 = vld [vmem:[%s2 + $0xc8] sm:$0xff]
  %v76 = vld [vmem:[%s2 + $0xd0] sm:$0xff]
  %v77 = vld [vmem:[%s2 + $0xd8] sm:$0xff]
  %v78 = vld [vmem:[%s2 + $0xe0] sm:$0xff]
  %v79 = vld [vmem:[%s2 + $0xe8] sm:$0xff]
  %v80 = vld [vmem:[%s2 + $0xf0] sm:$0xff]
  %v81 = vld [vmem:[%s2 + $0xf8] sm:$0xff]
  %v82 = vld [vmem:[%s2 + $0x100] sm:$0xff]
  %v83 = vld [vmem:[%s2 + $0x108] sm:$0xff]
  %v84 = vld [vmem:[%s2 + $0x110] sm:$0xff]
  %v85 = vld [vmem:[%s2 + $0x118] sm:$0xff]
  %v86 = vld [vmem:[%s2 + $0x120] sm:$0xff]
  %v87 = vld [vmem:[%s2 + $0x128] sm:$0xff]
  %v88 = vld [vmem:[%s2 + $0x130] sm:$0xff]
  %v89 = vld [vmem:[%s2 + $0x138] sm:$0xff]
  %v90 = vld [vmem:[%s2 + $0x140] sm:$0xff]
  %v91 = vld [vmem:[%s2 + $0x148] sm:$0xff]
  %v92 = vld [vmem:[%s2 + $0x150] sm:$0xff]
  %v93 = vld [vmem:[%s2 + $0x158] sm:$0xff]
  %v94 = vld [vmem:[%s2 + $0x160] sm:$0xff]
  %v95 = vld [vmem:[%s2 + $0x168] sm:$0xff]
  %v96 = vld [vmem:[%s2 + $0x170] sm:$0xff]
  %v97 = vld [vmem:[%s2 + $0x178] sm:$0xff]
  %v98 = vld [vmem:[%s2 + $0x180] sm:$0xff]
  %v99 = vld [vmem:[%s2 + $0x188] sm:$0xff]
  %v100 = vld [vmem:[%s2 + $0x190] sm:$0xff]
  %v101 = vld [vmem:[%s2 + $0x198] sm:$0xff]
  %v102 = vld [vmem:[%s2 + $0x1a0] sm:$0xff]
  %v103 = vld [vmem:[%s2 + $0x1a8] sm:$0xff]
  %v104 = vld [vmem:[%s2 + $0x1b0] sm:$0xff]
  %v105 = vld [vmem:[%s2 + $0x1b8] sm:$0xff]
  %v106 = vld [vmem:[%s2 + $0x1c0] sm:$0xff]
  %v107 = vld [vmem:[%s2 + $0x1c8] sm:$0xff]
  %v108 = vld [vmem:[%s2 + $0x1d0] sm:$0xff]
  %v109 = vld [vmem:[%s2 + $0x1d8] sm:$0xff]
  %vm110 = vcmask 916480
  %v112 = vsel %vm110, %v41, 0
  %v115 = vsel %vm110, %v43, 0
  %v118 = vsel %vm110, %v45, 0
  %v121 = vsel %vm110, %v47, 0
  %v124 = vsel %vm110, %v49, 0
  %126 = vmatprep.subr.mxu0 %v51
  %127 = vmatpush1.msra.mxu0 %v50
  %128 = vmatprep.subr.mxu0 %v53
  %129 = vmatpush1.msra.mxu0 %v52
  %130 = vmatprep.subr.mxu0 %v55
  %131 = vmatpush1.msra.mxu0 %v54
  %132 = vmatprep.subr.mxu0 %v57
  %133 = vmatpush1.msra.mxu0 %v56
  %134 = vmatprep.subr.mxu0 %v59
  %135 = vmatpush1.msra.mxu0 %v58
  %136 = vmatprep.subr.mxu0 %v61
  %137 = vmatpush1.msra.mxu0 %v60
  %138 = vmatprep.subr.mxu0 %v63
  %139 = vmatpush1.msra.mxu0 %v62
  %140 = vmatprep.subr.mxu0 %v65
  %141 = vmatpush1.msra.mxu0 %v64
  %142 = vmatprep.subr.mxu0 %v67
  %143 = vmatpush1.msra.mxu0 %v66
  %144 = vmatprep.subr.mxu0 %v69
  %145 = vmatpush1.msra.mxu0 %v68
  %146 = vmatprep.subr.mxu0 %v71
  %147 = vmatpush1.msra.mxu0 %v70
  %148 = vmatprep.subr.mxu0 %v73
  %149 = vmatpush1.msra.mxu0 %v72
  %150 = vmatprep.subr.mxu0 %v75
  %151 = vmatpush1.msra.mxu0 %v74
  %152 = vmatprep.subr.mxu0 %v77
  %153 = vmatpush1.msra.mxu0 %v76
  %154 = vmatprep.subr.mxu0 %v79
  %155 = vmatpush1.msra.mxu0 %v78
  %156 = vmatprep.subr.mxu0 %v81
  %157 = vmatpush1.msra.mxu0 %v80
  %158 = vmatprep.subr.mxu0 %v83
  %159 = vmatpush1.msra.mxu0 %v82
  %160 = vmatprep.subr.mxu0 %v85
  %161 = vmatpush1.msra.mxu0 %v84
  %162 = vmatprep.subr.mxu0 %v87
  %163 = vmatpush1.msra.mxu0 %v86
  %164 = vmatprep.subr.mxu0 %v89
  %165 = vmatpush1.msra.mxu0 %v88
  %166 = vmatprep.subr.mxu0 %v91
  %167 = vmatpush1.msra.mxu0 %v90
  %168 = vmatprep.subr.mxu0 %v93
  %169 = vmatpush1.msra.mxu0 %v92
  %170 = vmatprep.subr.mxu0 %v95
  %171 = vmatpush1.msra.mxu0 %v94
  %172 = vmatprep.subr.mxu0 %v97
  %173 = vmatpush1.msra.mxu0 %v96
  %174 = vmatprep.subr.mxu0 %v99
  %175 = vmatpush1.msra.mxu0 %v98
  %176 = vmatprep.subr.mxu0 %v101
  %177 = vmatpush1.msra.mxu0 %v100
  %178 = vmatprep.subr.mxu0 %v103
  %179 = vmatpush1.msra.mxu0 %v102
  %180 = vmatprep.subr.mxu0 %v105
  %181 = vmatpush1.msra.mxu0 %v104
  %182 = vmatprep.subr.mxu0 %v107
  %183 = vmatpush1.msra.mxu0 %v106
  %184 = vmatprep.subr.mxu0 %v109
  %185 = vmatpush1.msra.mxu0 %v108
  %186 = vmatprep.subr.mxu0 0.0
  %187 = vmatpush1.msra.mxu0 0.0
  %188 = vmatprep.subr.mxu0 0.0
  %189 = vmatpush1.msra.mxu0 0.0
  %190 = vmatprep.mubr.f32.mxu0 %v112
  %191 = vmatmul.mubr.f32.gmra.mrb[0].mxu0 %v40
  %v192 = vpop.f32.mrb[0].mxu0
  %v193 = vadd.f32 0.0, %v192
  %v194 = vpop.f32.mrb[0].mxu0
  %v195 = vadd.f32 0.0, %v194
  %196 = vmatprep.mubr.f32.mxu0 %v115
  %197 = vmatmul.mubr.f32.gmra.mrb[0].mxu0 %v42
  %v198 = vpop.f32.mrb[0].mxu0
  %v199 = vadd.f32 0.0, %v198
  %v200 = vpop.f32.mrb[0].mxu0
  %v201 = vadd.f32 0.0, %v200
  %202 = vmatprep.mubr.f32.mxu0 %v118
  %203 = vmatmul.mubr.f32.gmra.mrb[0].mxu0 %v44
  %v204 = vpop.f32.mrb[0].mxu0
  %v205 = vadd.f32 0.0, %v204
  %v206 = vpop.f32.mrb[0].mxu0
  %v207 = vadd.f32 0.0, %v206
  %208 = vmatprep.mubr.f32.mxu0 %v121
  %209 = vmatmul.mubr.f32.gmra.mrb[0].mxu0 %v46
  %v210 = vpop.f32.mrb[0].mxu0
  %v211 = vadd.f32 0.0, %v210
  %v212 = vpop.f32.mrb[0].mxu0
  %v213 = vadd.f32 0.0, %v212
  %214 = vmatprep.mubr.f32.mxu0 %v124
  %215 = vmatmul.mubr.f32.gmra.mrb[0].mxu0 %v48
  %v216 = vpop.f32.mrb[0].mxu0
  %v217 = vadd.f32 0.0, %v216
  %v218 = vpop.f32.mrb[0].mxu0
  %v219 = vadd.f32 0.0, %v218
  %220 = vdwg.mxu0
  %221 = vst [vmem:[%s3] sm:$0xff] %v193
  %vm222 = vcmask 556032
  %223 = vst.msk [vmem:[%s3 + $0x8] sm:$0xff] %vm222, %v195
  %224 = vst [vmem:[%s3 + $0x10] sm:$0xff] %v199
  %225 = vst.msk [vmem:[%s3 + $0x18] sm:$0xff] %vm222, %v201
  %226 = vst [vmem:[%s3 + $0x20] sm:$0xff] %v205
  %227 = vst.msk [vmem:[%s3 + $0x28] sm:$0xff] %vm222, %v207
  %228 = vst [vmem:[%s3 + $0x30] sm:$0xff] %v211
  %229 = vst.msk [vmem:[%s3 + $0x38] sm:$0xff] %vm222, %v213
  %230 = vst [vmem:[%s3 + $0x40] sm:$0xff] %v217
  %231 = vst.msk [vmem:[%s3 + $0x48] sm:$0xff] %vm222, %v219
  // Predicated region
  $region14: #{_fused_hardsigmoid_mul_conv1x1.1} parent=0 // pred_check
    _
  $region15: #{_fused_hardsigmoid_mul_conv1x1.1} parent=0 // pred_check_branch
    %233 = sbr.rel (0) target = $region17
  $region16: #{_fused_hardsigmoid_mul_conv1x1.1} parent=0 // pred_region
    _
  $region17: #{_fused_hardsigmoid_mul_conv1x1.1} parent=0 // pred_fallthru
    _
  // Predicated region
  $region18: #{_fused_hardsigmoid_mul_conv1x1.1} parent=0 // pred_check
    _
  $region19: #{_fused_hardsigmoid_mul_conv1x1.1} parent=0 // pred_check_branch
    %235 = sbr.rel (0) target = $region21
  $region20: #{_fused_hardsigmoid_mul_conv1x1.1} parent=0 // pred_region
    _
  $region21: #{_fused_hardsigmoid_mul_conv1x1.1} parent=0 // pred_fallthru
    _

</llo_original>
